<compile_context>
chip_gen: v7x
topology: tpu7x:2x2x1
jax: 0.10.0
libtpu: 0.0.40
codegen_flags: <defaults>
</compile_context>

<pallas_src>
import functools

import jax
import jax.numpy as jnp
from jax.experimental import pallas as pl
from jax.experimental.pallas import tpu as pltpu


def _round_up(x, m):
    return ((x + m - 1) // m) * m


def _hinge_kernel(a_ref, p_ref, n_ref, o_ref, *, lamb, epsilon):
    # Differences in the native input dtype (bf16 stays bf16 on the VPU);
    # squared-sum reduction accumulated in f32.
    dp = a_ref[...] - p_ref[...]                                   # (TB, D)
    dn = a_ref[...] - n_ref[...]                                   # (TB, D)
    dp32 = dp.astype(jnp.float32)
    dn32 = dn.astype(jnp.float32)
    ssq_p = jnp.sum(dp32 * dp32, axis=-1, keepdims=True)           # (TB, 1)
    ssq_n = jnp.sum(dn32 * dn32, axis=-1, keepdims=True)           # (TB, 1)
    norm_p = jnp.sqrt(ssq_p)
    norm_n = jnp.sqrt(ssq_n)
    # label = +1  ->  eps - (lamb - norm) = eps - lamb + norm
    # label = -1  ->  eps + (lamb - norm) = eps + lamb - norm
    loss_p = jnp.maximum(epsilon - lamb + norm_p, 0.0)             # (TB, 1)
    loss_n = jnp.maximum(epsilon + lamb - norm_n, 0.0)             # (TB, 1)
    o_ref[...] = loss_p + loss_n                                   # (TB, 1)


def contrastive_hinge_loss(anchor, positive, negative, lamb=1.0, epsilon=1.0,
                           max_tile_rows=None):
    """anchor, positive, negative: (B, D) float arrays. Returns scalar f32 loss."""
    B, D = anchor.shape
    itemsize = jnp.dtype(anchor.dtype).itemsize
    # Sublane multiple for packed dtypes: f32 -> 8 rows, bf16 -> 16, 8-bit -> 32.
    sub = max(8, 32 // itemsize)

    # Batch-tile size: keep 3 inputs x 2 pipeline buffers under ~20 MiB of VMEM
    # (fits every TPU generation, including v7x's smaller 64 MiB VMEM), but
    # never smaller than one sublane group and never larger than needed for B.
    budget = 20 * 1024 * 1024
    tb = max(sub, min(1024, (budget // (6 * D * itemsize)) // sub * sub))
    if max_tile_rows is not None:
        tb = max(sub, min(tb, (max_tile_rows // sub) * sub))
    tb = min(tb, _round_up(B, sub))

    num_tiles = pl.cdiv(B, tb)
    B_pad = num_tiles * tb
    if B_pad != B:
        # Zero-pad ragged batch; padded rows contribute 2*eps but are sliced
        # off before the final reduction below, so they never reach the loss.
        pad = ((0, B_pad - B), (0, 0))
        anchor = jnp.pad(anchor, pad)
        positive = jnp.pad(positive, pad)
        negative = jnp.pad(negative, pad)

    kernel = functools.partial(_hinge_kernel,
                               lamb=float(lamb), epsilon=float(epsilon))

    per_row = pl.pallas_call(
        kernel,
        out_shape=jax.ShapeDtypeStruct((B_pad, 1), jnp.float32),
        grid_spec=pltpu.PrefetchScalarGridSpec(
            num_scalar_prefetch=0,
            grid=(num_tiles,),
            in_specs=[
                pl.BlockSpec((tb, D), lambda i: (i, 0)),
                pl.BlockSpec((tb, D), lambda i: (i, 0)),
                pl.BlockSpec((tb, D), lambda i: (i, 0)),
            ],
            out_specs=pl.BlockSpec((tb, 1), lambda i: (i, 0)),
        ),
        compiler_params=pltpu.CompilerParams(
            # Each grid point owns its own output block -> fully parallel;
            # on v7x this shards the batch tiles across both TensorCores.
            dimension_semantics=("parallel",),
            vmem_limit_bytes=30 * 1024 * 1024,
        ),
        cost_estimate=pl.CostEstimate(
            flops=7 * B_pad * D,
            transcendentals=2 * B_pad,
            bytes_accessed=3 * B_pad * D * itemsize + 4 * B_pad,
        ),
    )(anchor, positive, negative)

    # Tiny final reduction over the per-row hinge losses (padded rows excluded).
    return jnp.sum(per_row[:B, 0])


def _reference(anchor, positive, negative, lamb=1.0, epsilon=1.0):
    # Pure-JAX reference mirroring the PyTorch code (f32 math).
    a = anchor.astype(jnp.float32)
    p = positive.astype(jnp.float32)
    n = negative.astype(jnp.float32)
    labels = jnp.concatenate([jnp.ones(p.shape[0]), -jnp.ones(n.shape[0])])
    distances = jnp.concatenate([a - p, a - n], axis=0)
    norms = jnp.linalg.norm(distances, axis=-1)
    return jnp.sum(jnp.clip(epsilon - labels * (lamb - norms), 0.0, None))


if __name__ == "__main__":
    key = jax.random.PRNGKey(0)

    # Test 1: small lane-dense case (B=16, D=128), f32.
    k_a, k_p, k_n = jax.random.split(key, 3)
    B, D = 16, 128
    anchor = jax.random.normal(k_a, (B, D), dtype=jnp.float32)
    positive = jax.random.normal(k_p, (B, D), dtype=jnp.float32)
    negative = jax.random.normal(k_n, (B, D), dtype=jnp.float32)
    loss = contrastive_hinge_loss(anchor, positive, negative)
    jax.block_until_ready(loss)
    ref = _reference(anchor, positive, negative)
    assert jnp.allclose(loss, ref, rtol=1e-4, atol=1e-2), (loss, ref)

    # Test 2: multi-tile grid with ragged batch and non-128 D (B=200, D=96).
    k_a2, k_p2, k_n2 = jax.random.split(jax.random.PRNGKey(1), 3)
    B2, D2 = 200, 96
    a2 = jax.random.normal(k_a2, (B2, D2), dtype=jnp.float32)
    p2 = jax.random.normal(k_p2, (B2, D2), dtype=jnp.float32)
    n2 = jax.random.normal(k_n2, (B2, D2), dtype=jnp.float32)
    loss2 = contrastive_hinge_loss(a2, p2, n2, max_tile_rows=64)
    jax.block_until_ready(loss2)
    ref2 = _reference(a2, p2, n2)
    assert jnp.allclose(loss2, ref2, rtol=1e-4, atol=1e-2), (loss2, ref2)

    # Test 3: bf16 inputs (subtraction stays bf16, accumulation in f32).
    a3 = anchor.astype(jnp.bfloat16)
    p3 = positive.astype(jnp.bfloat16)
    n3 = negative.astype(jnp.bfloat16)
    loss3 = contrastive_hinge_loss(a3, p3, n3)
    jax.block_until_ready(loss3)
    ref3 = _reference(a3, p3, n3)
    assert jnp.allclose(loss3, ref3, rtol=3e-2, atol=2.0), (loss3, ref3)

    print("KERNEL_OK")
</pallas_src>

<mosaic_0001>
module attributes {stable_mosaic.version = 11 : i64} {
  func.func @_hinge_kernel(%arg0: i32, %arg1: memref<16x128xf32, #tpu.memory_space<vmem>>, %arg2: memref<16x128xf32, #tpu.memory_space<vmem>>, %arg3: memref<16x128xf32, #tpu.memory_space<vmem>>, %arg4: memref<16x1xf32, #tpu.memory_space<vmem>>) attributes {dimension_semantics = [#tpu.dimension_semantics<parallel>], iteration_bounds = array<i64: 1>, scalar_prefetch = 0 : i64, scratch_operands = 0 : i64, tpu.core_type = #tpu.core_type<tc>, window_params = [{transform_indices = @transform_0, window_bounds = array<i64: 16, 128>}, {transform_indices = @transform_1, window_bounds = array<i64: 16, 128>}, {transform_indices = @transform_2, window_bounds = array<i64: 16, 128>}, {transform_indices = @transform_3, window_bounds = array<i64: 16, 1>}]} {
    %c0 = arith.constant 0 : index
    %c0_0 = arith.constant 0 : index
    %0 = vector.load %arg1[%c0, %c0_0] : memref<16x128xf32, #tpu.memory_space<vmem>>, vector<16x128xf32>
    %c0_1 = arith.constant 0 : index
    %c0_2 = arith.constant 0 : index
    %1 = vector.load %arg2[%c0_1, %c0_2] : memref<16x128xf32, #tpu.memory_space<vmem>>, vector<16x128xf32>
    %2 = arith.subf %0, %1 : vector<16x128xf32>
    %c0_3 = arith.constant 0 : index
    %c0_4 = arith.constant 0 : index
    %3 = vector.load %arg1[%c0_3, %c0_4] : memref<16x128xf32, #tpu.memory_space<vmem>>, vector<16x128xf32>
    %c0_5 = arith.constant 0 : index
    %c0_6 = arith.constant 0 : index
    %4 = vector.load %arg3[%c0_5, %c0_6] : memref<16x128xf32, #tpu.memory_space<vmem>>, vector<16x128xf32>
    %5 = arith.subf %3, %4 : vector<16x128xf32>
    %6 = arith.mulf %2, %2 : vector<16x128xf32>
    %cst = arith.constant dense<0.000000e+00> : vector<16xf32>
    %7 = vector.multi_reduction <add>, %6, %cst [1] : vector<16x128xf32> to vector<16xf32>
    %8 = vector.shape_cast %7 : vector<16xf32> to vector<16x1xf32>
    %9 = arith.mulf %5, %5 : vector<16x128xf32>
    %cst_7 = arith.constant dense<0.000000e+00> : vector<16xf32>
    %10 = vector.multi_reduction <add>, %9, %cst_7 [1] : vector<16x128xf32> to vector<16xf32>
    %11 = vector.shape_cast %10 : vector<16xf32> to vector<16x1xf32>
    %12 = math.sqrt %8 : vector<16x1xf32>
    %13 = math.sqrt %11 : vector<16x1xf32>
    %cst_8 = arith.constant 0.000000e+00 : f32
    %14 = vector.broadcast %cst_8 : f32 to vector<16x1xf32>
    %15 = arith.addf %14, %12 : vector<16x1xf32>
    %cst_9 = arith.constant 0.000000e+00 : f32
    %16 = vector.broadcast %cst_9 : f32 to vector<16x1xf32>
    %17 = arith.maximumf %15, %16 : vector<16x1xf32>
    %cst_10 = arith.constant 2.000000e+00 : f32
    %18 = vector.broadcast %cst_10 : f32 to vector<16x1xf32>
    %19 = arith.subf %18, %13 : vector<16x1xf32>
    %cst_11 = arith.constant 0.000000e+00 : f32
    %20 = vector.broadcast %cst_11 : f32 to vector<16x1xf32>
    %21 = arith.maximumf %19, %20 : vector<16x1xf32>
    %22 = arith.addf %17, %21 : vector<16x1xf32>
    %c0_12 = arith.constant 0 : index
    %c0_13 = arith.constant 0 : index
    %23 = vector.load %arg4[%c0_12, %c0_13] : memref<16x1xf32, #tpu.memory_space<vmem>>, vector<16x1xf32>
    tpu.vector_store %arg4[%c0_12, %c0_13], %22 {strides = array<i32>} : memref<16x1xf32, #tpu.memory_space<vmem>>, vector<16x1xf32>,
    return
  }
  func.func @transform_0(%arg0: i32) -> (i32, i32) {
    %c0_i32 = arith.constant 0 : i32
    %c0_i32_0 = arith.constant 0 : i32
    return %arg0, %c0_i32 : i32, i32
  }
  func.func @transform_1(%arg0: i32) -> (i32, i32) {
    %c0_i32 = arith.constant 0 : i32
    %c0_i32_0 = arith.constant 0 : i32
    return %arg0, %c0_i32 : i32, i32
  }
  func.func @transform_2(%arg0: i32) -> (i32, i32) {
    %c0_i32 = arith.constant 0 : i32
    %c0_i32_0 = arith.constant 0 : i32
    return %arg0, %c0_i32 : i32, i32
  }
  func.func @transform_3(%arg0: i32) -> (i32, i32) {
    %c0_i32 = arith.constant 0 : i32
    %c0_i32_0 = arith.constant 0 : i32
    return %arg0, %c0_i32 : i32, i32
  }
}

</mosaic_0001>

<llo_original>
// kernel: tpu_custom_call.1
$region0: #{tpu_custom_call.1}
  #allocation0 [shape = 'u32[]', space=smem, size = 0x4, offset = 0x4, fixed_abs, tag = 'smem constant byte address 0x4 - core index']
  #allocation1 [shape = 'u32[144,128]{1,0:T(1,128)}', space=vmem, size = 0x12000, scoped, tag = 'internal scratch']
  %s0 = inlined_call_operand.hbm [shape: f32[16,128], index: 0, kind: input, shape index: {}]
  %s1 = inlined_call_operand.hbm [shape: f32[16,128], index: 1, kind: input, shape index: {}]
  %s2 = inlined_call_operand.hbm [shape: f32[16,128], index: 2, kind: input, shape index: {}]
  %s3 = inlined_call_operand.vmem [shape: f32[16,1], index: 3, kind: output, shape index: {}]
  %s4 = sld [smem:[#allocation0]]
  $region34: #{tpu_custom_call.1} parent=0
    _
  %s6 = ssub.s32 1, %s4
  %s7 = scalar_select 0, %s6, %s4
  $region1: #{tpu_custom_call.1} parent=0
    #allocation2 [shape = 'u8[8192]{0}', space=vmem, size = 0x2000, scoped, tag = 'input window, operand 0, single buffered']
    #allocation3 [shape = 's32[1]{0}', space=sflag, size = 0x4, scoped, tag = 'scoped memory for tpu_custom_call.1']
    #allocation4 [shape = 'u8[8192]{0}', space=vmem, size = 0x2000, scoped, tag = 'input window, operand 1, single buffered']
    #allocation5 [shape = 's32[1]{0}', space=sflag, size = 0x4, scoped, tag = 'scoped memory for tpu_custom_call.1']
    #allocation6 [shape = 'u8[8192]{0}', space=vmem, size = 0x2000, scoped, tag = 'input window, operand 2, single buffered']
    %8 = vsyncpa [#allocation3], 0
    %9 = vsyncpa [#allocation5], 0
    // Predicated region
    $region2: #{tpu_custom_call.1} parent=1 // pred_check
      _
    $region3: #{tpu_custom_call.1} parent=1 // pred_check_branch
      %11 = sbr.rel (0) target = $region5
    $region4: #{tpu_custom_call.1} parent=1 // pred_region
      %s13 = ssub.s32 256, 256
      %14 = vsyncadd [#allocation3], %s13
      %s15 = sshll.u32 [#allocation2], 4
      %s16 = int_to_ptr.vmem [resolvable:$true] %s15
      %21 = dma.hbm_to_vmem [thread:$0]  %s0, 256, %s16, [#allocation3], 128, 128, 8
    $region5: #{tpu_custom_call.1} parent=1 // pred_fallthru
      _
    // Predicated region
    $region6: #{tpu_custom_call.1} parent=1 // pred_check
      _
    $region7: #{tpu_custom_call.1} parent=1 // pred_check_branch
      %23 = sbr.rel (0) target = $region9
    $region8: #{tpu_custom_call.1} parent=1 // pred_region
      %s25 = ssub.s32 256, 256
      %26 = vsyncadd [#allocation5], %s25
      %s27 = sshll.u32 [#allocation4], 4
      %s28 = int_to_ptr.vmem [resolvable:$true] %s27
      %33 = dma.hbm_to_vmem [thread:$0]  %s1, 256, %s28, [#allocation5], 128, 128, 8
    $region9: #{tpu_custom_call.1} parent=1 // pred_fallthru
      _
    // Predicated region
    $region10: #{tpu_custom_call.1} parent=1 // pred_check
      _
    $region11: #{tpu_custom_call.1} parent=1 // pred_check_branch
      %35 = sbr.rel (0) target = $region13
    $region12: #{tpu_custom_call.1} parent=1 // pred_region
      %s37 = ssub.s32 256, 256
      %38 = vsyncadd [#allocation5], %s37
      %s39 = sshll.u32 [#allocation6], 4
      %s40 = int_to_ptr.vmem [resolvable:$true] %s39
      %45 = dma.hbm_to_vmem [thread:$0]  %s2, 256, %s40, [#allocation5], 128, 128, 8
    $region13: #{tpu_custom_call.1} parent=1 // pred_fallthru
      _
    // Predicated region
    $region14: #{tpu_custom_call.1} parent=1 // pred_check
      _
    $region15: #{tpu_custom_call.1} parent=1 // pred_check_branch
      %47 = sbr.rel (0) target = $region17
    $region16: #{tpu_custom_call.1} parent=1 // pred_region
      %48 = dma.done [#allocation3], 256
    $region17: #{tpu_custom_call.1} parent=1 // pred_fallthru
      _
    // Predicated region
    $region18: #{tpu_custom_call.1} parent=1 // pred_check
      _
    $region19: #{tpu_custom_call.1} parent=1 // pred_check_branch
      %50 = sbr.rel (0) target = $region21
    $region20: #{tpu_custom_call.1} parent=1 // pred_region
      %51 = dma.done [#allocation5], 256
    $region21: #{tpu_custom_call.1} parent=1 // pred_fallthru
      _
    // Predicated region
    $region22: #{tpu_custom_call.1} parent=1 // pred_check
      _
    $region23: #{tpu_custom_call.1} parent=1 // pred_check_branch
      %53 = sbr.rel (0) target = $region25
    $region24: #{tpu_custom_call.1} parent=1 // pred_region
      %54 = dma.done [#allocation5], 256
    $region25: #{tpu_custom_call.1} parent=1 // pred_fallthru
      _
    %v55 = vld [vmem:[#allocation2] sm:$0xff]
    %v56 = vld [vmem:[#allocation2 + $0x8] sm:$0xff]
    %v57 = vld [vmem:[#allocation4] sm:$0xff]
    %v58 = vld [vmem:[#allocation4 + $0x8] sm:$0xff]
    %v59 = vsub.f32 %v55, %v57
    %v60 = vsub.f32 %v56, %v58
    %v61 = vld [vmem:[#allocation6] sm:$0xff]
    %v62 = vld [vmem:[#allocation6 + $0x8] sm:$0xff]
    %v63 = vsub.f32 %v55, %v61
    %v64 = vsub.f32 %v56, %v62
    %v65 = vmul.f32 %v59, %v59
    %v66 = vmul.f32 %v60, %v60
    %67 = vadd.xlane.f32.xlu0 %v65
    %v68 = vpop.xlane.xlu0 %67
    %69 = vadd.xlane.f32.xlu0 %v66
    %v70 = vpop.xlane.xlu0 %69
    %v71 = vmul.f32 %v63, %v63
    %v72 = vmul.f32 %v64, %v64
    %73 = vadd.xlane.f32.xlu0 %v71
    %v74 = vpop.xlane.xlu0 %73
    %75 = vadd.xlane.f32.xlu0 %v72
    %v76 = vpop.xlane.xlu0 %75
    %v77 = vrsqrt.pop %v68
    %v78 = vmul.f32 %v68, %v77
    %vm79 = vcmp.eq.f32.partialorder %v68, inf
    %v80 = vsel %vm79, %v68, %v78
    %vm81 = vcmp.eq.f32.partialorder %v68, 0.0
    %v82 = vand.u32 %v68, 2147483648
    %v83 = vsel %vm81, %v82, %v80
    %v84 = vrsqrt.pop %v70
    %v85 = vmul.f32 %v70, %v84
    %vm86 = vcmp.eq.f32.partialorder %v70, inf
    %v87 = vsel %vm86, %v70, %v85
    %vm88 = vcmp.eq.f32.partialorder %v70, 0.0
    %v89 = vand.u32 %v70, 2147483648
    %v90 = vsel %vm88, %v89, %v87
    %v91 = vrsqrt.pop %v74
    %v92 = vmul.f32 %v74, %v91
    %vm93 = vcmp.eq.f32.partialorder %v74, inf
    %v94 = vsel %vm93, %v74, %v92
    %vm95 = vcmp.eq.f32.partialorder %v74, 0.0
    %v96 = vand.u32 %v74, 2147483648
    %v97 = vsel %vm95, %v96, %v94
    %v98 = vrsqrt.pop %v76
    %v99 = vmul.f32 %v76, %v98
    %vm100 = vcmp.eq.f32.partialorder %v76, inf
    %v101 = vsel %vm100, %v76, %v99
    %vm102 = vcmp.eq.f32.partialorder %v76, 0.0
    %v103 = vand.u32 %v76, 2147483648
    %v104 = vsel %vm102, %v103, %v101
    %v105 = vadd.f32 %v83, 0.0
    %v106 = vadd.f32 %v90, 0.0
    %v107 = vmax.f32 %v105, 0.0
    %v108 = vmax.f32 %v106, 0.0
    %v109 = vsub.f32 2.0, %v97
    %v110 = vsub.f32 2.0, %v104
    %v111 = vmax.f32 %v109, 0.0
    %v112 = vmax.f32 %v110, 0.0
    %v113 = vadd.f32 %v107, %v111
    %v114 = vadd.f32 %v108, %v112
    %vm115 = vcmask 7168
    %116 = vst.msk [vmem:[%s3] sm:$0xff] %vm115, %v113
    %117 = vst.msk [vmem:[%s3 + $0x8] sm:$0xff] %vm115, %v114
    // Predicated region
    $region26: #{tpu_custom_call.1} parent=1 // pred_check
      _
    $region27: #{tpu_custom_call.1} parent=1 // pred_check_branch
      %119 = sbr.rel (0) target = $region29
    $region28: #{tpu_custom_call.1} parent=1 // pred_region
      _
    $region29: #{tpu_custom_call.1} parent=1 // pred_fallthru
      _
    // Predicated region
    $region30: #{tpu_custom_call.1} parent=1 // pred_check
      _
    $region31: #{tpu_custom_call.1} parent=1 // pred_check_branch
      %121 = sbr.rel (0) target = $region33
    $region32: #{tpu_custom_call.1} parent=1 // pred_region
      _
    $region33: #{tpu_custom_call.1} parent=1 // pred_fallthru
      _
    %122 = vsyncpa [#allocation3], 1
    %123 = vsyncpa [#allocation5], 1

</llo_original>
